<compile_context>
chip_gen: v7x
topology: tpu7x:2x2x1
jax: 0.10.0
libtpu: 0.0.40
codegen_flags: <defaults>
</compile_context>

<pallas_src>
import functools

import jax
import jax.numpy as jnp
from jax.experimental import pallas as pl
from jax.experimental.pallas import tpu as pltpu


def club_mi_kernel(x_ref, y_ref, w1_ref, w2_ref, b_ref, out_ref, acc_ref, *,
                   n_total, y_dim, h_cat, tile_n, need_mask):
    pid = pl.program_id(0)
    nsteps = pl.num_programs(0)

    @pl.when(pid == 0)
    def _():
        acc_ref[...] = jnp.zeros_like(acc_ref)

    x = x_ref[...].astype(jnp.float32)                 # (tile_n, x_dim)
    y = y_ref[...].astype(jnp.float32)                 # (tile_n, Dy)
    w1 = w1_ref[...]                                   # (x_dim, 2h)  = [w1_mu | w1_lv]
    w2 = w2_ref[...]                                   # (2h, 2Dy)    = blockdiag(w2_mu, w2_lv)

    b = b_ref[...]                                     # (4, C)
    b1 = b[0:1, :h_cat]                                # (1, 2h)
    b2 = b[1:2, :2 * y_dim]                            # (1, 2Dy)
    ey = b[2:3, :y_dim]                                # (1, Dy)  E[y]   over full batch
    ey2 = b[3:4, :y_dim]                               # (1, Dy)  E[y^2] over full batch

    # Fused layer 1 (both branches in one MXU pass) + ReLU.
    h1 = jnp.maximum(
        jnp.dot(x, w1, preferred_element_type=jnp.float32) + b1, 0.0)   # (tile_n, 2h)
    # Fused layer 2 via block-diagonal weights: [mu | logvar_pre].
    ml = jnp.dot(h1, w2, preferred_element_type=jnp.float32) + b2       # (tile_n, 2Dy)
    mu = ml[:, :y_dim]
    logvar = jnp.tanh(ml[:, y_dim:])

    inv_2var = 0.5 * jnp.exp(-logvar)                                   # (tile_n, Dy)  (EUP)

    # positive - negative with the O(N^2) broadcast expanded algebraically.
    pos_sq = (mu - y) ** 2
    neg_sq = ey2 - 2.0 * mu * ey + mu * mu
    diff = (neg_sq - pos_sq) * inv_2var                                 # (tile_n, Dy)

    if need_mask:
        # Mask padded rows of the (possibly partial) last tile out of the sum.
        row = jax.lax.broadcasted_iota(jnp.int32, (tile_n, 1), 0) + pid * tile_n
        diff = jnp.where(row < n_total, diff, 0.0)

    # Per-lane partial accumulator; cross-lane reduce deferred to finalize.
    acc_ref[...] += jnp.sum(diff, axis=0, keepdims=True)                # (1, Dy)

    @pl.when(pid == nsteps - 1)
    def _():
        out_ref[...] = jnp.sum(acc_ref[...], axis=1, keepdims=True) * (1.0 / n_total)


def mutual_information_loss(x, y, params, *, tile_n=128):
    x = x.reshape(-1, x.shape[-1])
    y = y.reshape(-1, y.shape[-1])
    n, x_dim = x.shape
    _, y_dim = y.shape
    h = params["w1m"].shape[1]          # CLUB inner width = hidden_dim // 2
    h_cat = 2 * h
    dy2 = 2 * y_dim

    # ---- pack parameters into DMA-friendly resident arrays (once, in wrapper) ----
    w1_cat = jnp.concatenate([params["w1m"], params["w1v"]], axis=1)       # (x_dim, 2h)
    w2_blk = jnp.zeros((h_cat, dy2), jnp.float32)
    w2_blk = w2_blk.at[:h, :y_dim].set(params["w2m"])
    w2_blk = w2_blk.at[h:, y_dim:].set(params["w2v"])                      # (2h, 2Dy)

    yf = y.astype(jnp.float32)
    ey = jnp.mean(yf, axis=0, keepdims=True)                               # (1, Dy)
    ey2 = jnp.mean(yf * yf, axis=0, keepdims=True)                         # (1, Dy)

    C = max(h_cat, dy2)
    b_blob = jnp.zeros((4, C), jnp.float32)
    b_blob = b_blob.at[0:1, :h_cat].set(
        jnp.concatenate([params["b1m"], params["b1v"]], axis=1))
    b_blob = b_blob.at[1:2, :dy2].set(
        jnp.concatenate([params["b2m"], params["b2v"]], axis=1))
    b_blob = b_blob.at[2:3, :y_dim].set(ey)
    b_blob = b_blob.at[3:4, :y_dim].set(ey2)

    tile_n = n if n <= tile_n else tile_n
    grid = (pl.cdiv(n, tile_n),)
    need_mask = (n % tile_n) != 0

    kernel = functools.partial(club_mi_kernel, n_total=n, y_dim=y_dim,
                               h_cat=h_cat, tile_n=tile_n, need_mask=need_mask)

    mi = pl.pallas_call(
        kernel,
        out_shape=jax.ShapeDtypeStruct((1, 1), jnp.float32),
        grid_spec=pltpu.PrefetchScalarGridSpec(
            num_scalar_prefetch=0,
            grid=grid,
            in_specs=[
                pl.BlockSpec((tile_n, x_dim), lambda i: (i, 0)),
                pl.BlockSpec((tile_n, y_dim), lambda i: (i, 0)),
                pl.BlockSpec((x_dim, h_cat), lambda i: (0, 0)),   # resident fused W1
                pl.BlockSpec((h_cat, dy2), lambda i: (0, 0)),     # resident fused W2
                pl.BlockSpec((4, C), lambda i: (0, 0)),           # biases + y stats
            ],
            out_specs=pl.BlockSpec((1, 1), lambda i: (0, 0)),
            scratch_shapes=[pltpu.VMEM((1, y_dim), jnp.float32)],
        ),
        compiler_params=pltpu.CompilerParams(
            dimension_semantics=("arbitrary",)),
    )(x, y, w1_cat, w2_blk, b_blob)

    # softplus on the final scalar (cheaper than a lane-sparse EUP op in the epilogue).
    return jax.nn.softplus(mi[0, 0])


def init_params(key, x_dim, y_dim, hidden_dim):
    """Deterministic PyTorch-Linear-style init (uniform +/- 1/sqrt(fan_in))."""
    h = hidden_dim // 2  # CLUB uses hidden_size // 2 for the inner layer
    ks = jax.random.split(key, 8)

    def linear(kw, kb, fan_in, fan_out):
        bound = 1.0 / (fan_in ** 0.5)
        w = jax.random.uniform(kw, (fan_in, fan_out), jnp.float32, -bound, bound)
        b = jax.random.uniform(kb, (1, fan_out), jnp.float32, -bound, bound)
        return w, b

    w1m, b1m = linear(ks[0], ks[1], x_dim, h)
    w2m, b2m = linear(ks[2], ks[3], h, y_dim)
    w1v, b1v = linear(ks[4], ks[5], x_dim, h)
    w2v, b2v = linear(ks[6], ks[7], h, y_dim)
    return dict(w1m=w1m, b1m=b1m, w2m=w2m, b2m=b2m,
                w1v=w1v, b1v=b1v, w2v=w2v, b2v=b2v)


def reference_forward(x, y, p):
    """Pure-JAX reference with the literal (N, N, Dy) broadcast, as in PyTorch."""
    h_mu = jnp.maximum(x @ p["w1m"] + p["b1m"], 0.0)
    mu = h_mu @ p["w2m"] + p["b2m"]
    h_lv = jnp.maximum(x @ p["w1v"] + p["b1v"], 0.0)
    logvar = jnp.tanh(h_lv @ p["w2v"] + p["b2v"])
    positive = -(mu - y) ** 2 / 2.0 / jnp.exp(logvar)
    negative = -((y[None, :, :] - mu[:, None, :]) ** 2).mean(axis=1) / 2.0 / jnp.exp(logvar)
    mi = (positive.sum(-1) - negative.sum(-1)).mean()
    return jax.nn.softplus(mi)


if __name__ == "__main__":
    # N=200 with TILE_N=128 -> 2 grid steps; partial last tile exercises masking
    # and the cross-step accumulator.
    N, X_DIM, Y_DIM, HIDDEN = 200, 16, 8, 64

    key = jax.random.PRNGKey(0)
    kx, ky, kp = jax.random.split(key, 3)
    x = jax.random.normal(kx, (N, X_DIM), jnp.float32)
    y = jax.random.normal(ky, (N, Y_DIM), jnp.float32)
    params = init_params(kp, X_DIM, Y_DIM, HIDDEN)

    mi_fn = jax.jit(functools.partial(mutual_information_loss, tile_n=128))
    out = mi_fn(x, y, params)
    out = jax.block_until_ready(out)

    ref = reference_forward(x, y, params)
    assert jnp.allclose(out, ref, rtol=1e-4, atol=1e-4), (out, ref)

    print("KERNEL_OK")
</pallas_src>

<mosaic_0001>
module attributes {stable_mosaic.version = 11 : i64} {
  func.func @club_mi_kernel(%arg0: i32, %arg1: memref<128x16xf32, #tpu.memory_space<vmem>>, %arg2: memref<128x8xf32, #tpu.memory_space<vmem>>, %arg3: memref<16x64xf32, #tpu.memory_space<vmem>>, %arg4: memref<64x16xf32, #tpu.memory_space<vmem>>, %arg5: memref<4x64xf32, #tpu.memory_space<vmem>>, %arg6: memref<1x1xf32, #tpu.memory_space<vmem>>, %arg7: memref<1x8xf32, #tpu.memory_space<vmem>>) attributes {dimension_semantics = [#tpu.dimension_semantics<arbitrary>], iteration_bounds = array<i64: 2>, scalar_prefetch = 0 : i64, scratch_operands = 1 : i64, tpu.core_type = #tpu.core_type<tc>, window_params = [{transform_indices = @transform_0, window_bounds = array<i64: 128, 16>}, {transform_indices = @transform_1, window_bounds = array<i64: 128, 8>}, {pipeline_mode = #tpu.pipeline_mode<synchronous>, transform_indices = @transform_2, window_bounds = array<i64: 16, 64>}, {pipeline_mode = #tpu.pipeline_mode<synchronous>, transform_indices = @transform_3, window_bounds = array<i64: 64, 16>}, {pipeline_mode = #tpu.pipeline_mode<synchronous>, transform_indices = @transform_4, window_bounds = array<i64: 4, 64>}, {pipeline_mode = #tpu.pipeline_mode<synchronous>, transform_indices = @transform_5, window_bounds = array<i64: 1, 1>}]} {
    %c0_i32 = arith.constant 0 : i32
    %0 = arith.cmpi eq, %arg0, %c0_i32 : i32
    %1 = arith.extui %0 : i1 to i32
    %c0_i32_0 = arith.constant 0 : i32
    %2 = arith.cmpi ne, %1, %c0_i32_0 : i32
    scf.if %2 {
      %cst_22 = arith.constant 0.000000e+00 : f32
      %58 = vector.broadcast %cst_22 : f32 to vector<1x8xf32>
      %c0_23 = arith.constant 0 : index
      %c0_24 = arith.constant 0 : index
      %59 = vector.load %arg7[%c0_23, %c0_24] : memref<1x8xf32, #tpu.memory_space<vmem>>, vector<1x8xf32>
      tpu.vector_store %arg7[%c0_23, %c0_24], %58 {strides = array<i32>} : memref<1x8xf32, #tpu.memory_space<vmem>>, vector<1x8xf32>,
    } else {
    }
    %c0 = arith.constant 0 : index
    %c0_1 = arith.constant 0 : index
    %3 = vector.load %arg1[%c0, %c0_1] : memref<128x16xf32, #tpu.memory_space<vmem>>, vector<128x16xf32>
    %c0_2 = arith.constant 0 : index
    %c0_3 = arith.constant 0 : index
    %4 = vector.load %arg2[%c0_2, %c0_3] : memref<128x8xf32, #tpu.memory_space<vmem>>, vector<128x8xf32>
    %c0_4 = arith.constant 0 : index
    %c0_5 = arith.constant 0 : index
    %5 = vector.load %arg3[%c0_4, %c0_5] : memref<16x64xf32, #tpu.memory_space<vmem>>, vector<16x64xf32>
    %c0_6 = arith.constant 0 : index
    %c0_7 = arith.constant 0 : index
    %6 = vector.load %arg4[%c0_6, %c0_7] : memref<64x16xf32, #tpu.memory_space<vmem>>, vector<64x16xf32>
    %c0_8 = arith.constant 0 : index
    %c0_9 = arith.constant 0 : index
    %7 = vector.load %arg5[%c0_8, %c0_9] : memref<4x64xf32, #tpu.memory_space<vmem>>, vector<4x64xf32>
    %8 = vector.extract_strided_slice %7 {offsets = [0, 0], sizes = [1, 64], strides = [1, 1]} : vector<4x64xf32> to vector<1x64xf32>
    %9 = vector.extract_strided_slice %7 {offsets = [1, 0], sizes = [1, 16], strides = [1, 1]} : vector<4x64xf32> to vector<1x16xf32>
    %10 = vector.extract_strided_slice %7 {offsets = [2, 0], sizes = [1, 8], strides = [1, 1]} : vector<4x64xf32> to vector<1x8xf32>
    %11 = vector.extract_strided_slice %7 {offsets = [3, 0], sizes = [1, 8], strides = [1, 1]} : vector<4x64xf32> to vector<1x8xf32>
    %cst = arith.constant dense<0.000000e+00> : vector<128x64xf32>
    %12 = tpu.matmul %3, %5, %cst {dimension_numbers = #tpu.dot_dimension_numbers<[1], [0], [0], [1], [0, 0, 1, 1], [], []>} : vector<128x16xf32>, vector<16x64xf32>, vector<128x64xf32> -> vector<128x64xf32>
    %13 = vector.broadcast %8 : vector<1x64xf32> to vector<128x64xf32>
    %14 = arith.addf %12, %13 : vector<128x64xf32>
    %cst_10 = arith.constant 0.000000e+00 : f32
    %15 = vector.broadcast %cst_10 : f32 to vector<128x64xf32>
    %16 = arith.maximumf %14, %15 : vector<128x64xf32>
    %cst_11 = arith.constant dense<0.000000e+00> : vector<128x16xf32>
    %17 = tpu.matmul %16, %6, %cst_11 {dimension_numbers = #tpu.dot_dimension_numbers<[1], [0], [0], [1], [0, 0, 1, 1], [], []>} : vector<128x64xf32>, vector<64x16xf32>, vector<128x16xf32> -> vector<128x16xf32>
    %18 = vector.broadcast %9 : vector<1x16xf32> to vector<128x16xf32>
    %19 = arith.addf %17, %18 : vector<128x16xf32>
    %20 = vector.extract_strided_slice %19 {offsets = [0, 0], sizes = [128, 8], strides = [1, 1]} : vector<128x16xf32> to vector<128x8xf32>
    %21 = vector.extract_strided_slice %19 {offsets = [0, 8], sizes = [128, 8], strides = [1, 1]} : vector<128x16xf32> to vector<128x8xf32>
    %22 = math.tanh %21 : vector<128x8xf32>
    %cst_12 = arith.constant 0.000000e+00 : f32
    %23 = vector.broadcast %cst_12 : f32 to vector<128x8xf32>
    %24 = arith.subf %23, %22 : vector<128x8xf32>
    %25 = math.exp %24 : vector<128x8xf32>
    %cst_13 = arith.constant 5.000000e-01 : f32
    %26 = vector.broadcast %cst_13 : f32 to vector<128x8xf32>
    %27 = arith.mulf %26, %25 : vector<128x8xf32>
    %28 = arith.subf %20, %4 : vector<128x8xf32>
    %29 = arith.mulf %28, %28 : vector<128x8xf32>
    %cst_14 = arith.constant 2.000000e+00 : f32
    %30 = vector.broadcast %cst_14 : f32 to vector<128x8xf32>
    %31 = arith.mulf %30, %20 : vector<128x8xf32>
    %32 = vector.broadcast %10 : vector<1x8xf32> to vector<128x8xf32>
    %33 = arith.mulf %31, %32 : vector<128x8xf32>
    %34 = vector.broadcast %11 : vector<1x8xf32> to vector<128x8xf32>
    %35 = arith.subf %34, %33 : vector<128x8xf32>
    %36 = arith.mulf %20, %20 : vector<128x8xf32>
    %37 = arith.addf %35, %36 : vector<128x8xf32>
    %38 = arith.subf %37, %29 : vector<128x8xf32>
    %39 = arith.mulf %38, %27 : vector<128x8xf32>
    %40 = tpu.iota {dimensions = array<i32: 0>} : vector<128x1xi32>
    %c128_i32 = arith.constant 128 : i32
    %41 = arith.muli %arg0, %c128_i32 : i32
    %42 = vector.broadcast %41 : i32 to vector<128x1xi32>
    %43 = arith.addi %40, %42 : vector<128x1xi32>
    %c200_i32 = arith.constant 200 : i32
    %44 = vector.broadcast %c200_i32 : i32 to vector<128x1xi32>
    %45 = arith.cmpi slt, %43, %44 : vector<128x1xi32>
    %cst_15 = arith.constant 0.000000e+00 : f32
    %46 = vector.shape_cast %45 : vector<128x1xi1> to vector<128x1xi1>
    %47 = vector.broadcast %46 : vector<128x1xi1> to vector<128x8xi1>
    %48 = vector.broadcast %cst_15 : f32 to vector<128x8xf32>
    %49 = arith.select %47, %39, %48 : vector<128x8xi1>, vector<128x8xf32>
    %c0_16 = arith.constant 0 : index
    %c0_17 = arith.constant 0 : index
    %50 = vector.load %arg7[%c0_16, %c0_17] : memref<1x8xf32, #tpu.memory_space<vmem>>, vector<1x8xf32>
    %cst_18 = arith.constant dense<0.000000e+00> : vector<8xf32>
    %51 = vector.multi_reduction <add>, %49, %cst_18 [0] : vector<128x8xf32> to vector<8xf32>
    %52 = vector.shape_cast %51 : vector<8xf32> to vector<1x8xf32>
    %53 = arith.addf %50, %52 : vector<1x8xf32>
    %c0_19 = arith.constant 0 : index
    %c0_20 = arith.constant 0 : index
    %54 = vector.load %arg7[%c0_19, %c0_20] : memref<1x8xf32, #tpu.memory_space<vmem>>, vector<1x8xf32>
    tpu.vector_store %arg7[%c0_19, %c0_20], %53 {strides = array<i32>} : memref<1x8xf32, #tpu.memory_space<vmem>>, vector<1x8xf32>,
    %c1_i32 = arith.constant 1 : i32
    %55 = arith.cmpi eq, %arg0, %c1_i32 : i32
    %56 = arith.extui %55 : i1 to i32
    %c0_i32_21 = arith.constant 0 : i32
    %57 = arith.cmpi ne, %56, %c0_i32_21 : i32
    scf.if %57 {
      %c0_22 = arith.constant 0 : index
      %c0_23 = arith.constant 0 : index
      %58 = vector.load %arg7[%c0_22, %c0_23] : memref<1x8xf32, #tpu.memory_space<vmem>>, vector<1x8xf32>
      %cst_24 = arith.constant dense<0.000000e+00> : vector<1xf32>
      %59 = vector.multi_reduction <add>, %58, %cst_24 [1] : vector<1x8xf32> to vector<1xf32>
      %60 = vector.shape_cast %59 : vector<1xf32> to vector<1x1xf32>
      %cst_25 = arith.constant 5.000000e-03 : f32
      %61 = vector.broadcast %cst_25 : f32 to vector<1x1xf32>
      %62 = arith.mulf %60, %61 : vector<1x1xf32>
      %c0_26 = arith.constant 0 : index
      %c0_27 = arith.constant 0 : index
      %63 = vector.load %arg6[%c0_26, %c0_27] : memref<1x1xf32, #tpu.memory_space<vmem>>, vector<1x1xf32>
      tpu.vector_store %arg6[%c0_26, %c0_27], %62 {strides = array<i32>} : memref<1x1xf32, #tpu.memory_space<vmem>>, vector<1x1xf32>,
    } else {
    }
    return
  }
  func.func @transform_0(%arg0: i32) -> (i32, i32) {
    %c0_i32 = arith.constant 0 : i32
    %c0_i32_0 = arith.constant 0 : i32
    return %arg0, %c0_i32 : i32, i32
  }
  func.func @transform_1(%arg0: i32) -> (i32, i32) {
    %c0_i32 = arith.constant 0 : i32
    %c0_i32_0 = arith.constant 0 : i32
    return %arg0, %c0_i32 : i32, i32
  }
  func.func @transform_2(%arg0: i32) -> (i32, i32) {
    %c0_i32 = arith.constant 0 : i32
    %c0_i32_0 = arith.constant 0 : i32
    %c0_i32_1 = arith.constant 0 : i32
    return %c0_i32, %c0_i32_0 : i32, i32
  }
  func.func @transform_3(%arg0: i32) -> (i32, i32) {
    %c0_i32 = arith.constant 0 : i32
    %c0_i32_0 = arith.constant 0 : i32
    %c0_i32_1 = arith.constant 0 : i32
    return %c0_i32, %c0_i32_0 : i32, i32
  }
  func.func @transform_4(%arg0: i32) -> (i32, i32) {
    %c0_i32 = arith.constant 0 : i32
    %c0_i32_0 = arith.constant 0 : i32
    %c0_i32_1 = arith.constant 0 : i32
    return %c0_i32, %c0_i32_0 : i32, i32
  }
  func.func @transform_5(%arg0: i32) -> (i32, i32) {
    %c0_i32 = arith.constant 0 : i32
    %c0_i32_0 = arith.constant 0 : i32
    %c0_i32_1 = arith.constant 0 : i32
    return %c0_i32, %c0_i32_0 : i32, i32
  }
}

</mosaic_0001>

<llo_original>
// kernel: mutual_information_loss.1
$region0: #{mutual_information_loss.1}
  #allocation0 [shape = 'u32[]', space=smem, size = 0x4, offset = 0x4, fixed_abs, tag = 'smem constant byte address 0x4 - core index']
  #allocation1 [shape = 'u32[144,128]{1,0:T(1,128)}', space=vmem, size = 0x12000, scoped, tag = 'internal scratch']
  #allocation2 [shape = 'f32[1,8]{1,0:T(1,128)}', space=vmem, size = 0x200, scoped, tag = 'scratch operand']
  %s0 = inlined_call_operand.vmem [shape: f32[200,16], index: 0, kind: input, shape index: {}]
  %s1 = inlined_call_operand.vmem [shape: f32[200,8], index: 1, kind: input, shape index: {}]
  %s2 = inlined_call_operand.vmem [shape: f32[16,64], index: 2, kind: input, shape index: {}]
  %s3 = inlined_call_operand.vmem [shape: f32[64,16], index: 3, kind: input, shape index: {}]
  %s4 = inlined_call_operand.vmem [shape: f32[4,64], index: 4, kind: input, shape index: {}]
  %s5 = inlined_call_operand.hbm [shape: f32[1,1], index: 5, kind: output, shape index: {}]
  %s6 = sld [smem:[#allocation0]]
  $region61: #{mutual_information_loss.1} parent=0
    _
  %s8 = ssub.s32 1, %s6
  %s9 = scalar_select 0, %s8, %s6
  $region1: #{mutual_information_loss.1} parent=0
    #allocation3 [shape = 'u8[512]{0}', space=vmem, size = 0x400, scoped, tag = 'output window, operand 0, single buffered']
    #allocation4 [shape = 's32[2]{0}', space=sflag, size = 0x8, scoped, tag = 'scoped memory for mutual_information_loss.1']
    %10 = vsyncpa [#allocation4], 0
    loop: start=0, step=1, limit=4
    $region2: #{mutual_information_loss.1} parent=1 // loop_pre_header
      _
    $region3: #{mutual_information_loss.1} parent=1 // loop_header
      %s12 = sphi 0, %s16
      %p13 = scmp.ge.s32.totalorder %s12, 4
      %s22 = sphi 0, %s24
      %s25 = sphi 0, %s22
      %s26 = sphi 0, %s25
      %s42 = sphi 0, %s26
      %s48 = sphi 0, %s50
      %s51 = sphi 0, %s48
      %s52 = sphi 0, %s51
      %s68 = sphi 0, %s52
      %s72 = sphi 0, %s72
      %s74 = sphi 0, %s72
      %s75 = sphi 0, %s74
      %s89 = sphi 0, %s75
      %s93 = sphi 0, %s93
      %s95 = sphi 0, %s93
      %s96 = sphi 0, %s95
      %s110 = sphi 0, %s96
      %s114 = sphi 0, %s114
      %s116 = sphi 0, %s114
      %s117 = sphi 0, %s116
      %s131 = sphi 0, %s117
      %s135 = sphi 0, %s135
      %s137 = sphi 0, %s135
      %s138 = sphi 0, %s137
      %s152 = sphi 0, %s138
    $region4: #{mutual_information_loss.1} parent=1 // loop_header_branch
      %15 = sbr.rel (%p13) target = $region8
    $region5: #{mutual_information_loss.1} parent=1 // loop_body
      %s17 = ssub.s32 %s12, 1
      %s18 = ssub.s32 %s12, 2
      %s19 = sadd.s32 %s12, 1
      %s20 = ssub.s32 %s12, %s19
      %p21 = scmp.eq.s32.totalorder %s20, 0
      %s23 = sadd.s32 %s22, 1
      %s24 = scalar_select %p21, %s22, %s23
      %p27 = pneg %p21
      %p28 = scmp.eq.s32.totalorder %s12, 1
      %p29 = por %p27, %p28
      %p30 = scmp.ne.s32.totalorder %s22, %s25
      %p31 = scmp.eq.s32.totalorder %s12, 0
      %p32 = por %p30, %p31
      %p33 = scmp.ne.s32.totalorder %s22, %s25
      %p34 = scmp.eq.s32.totalorder %s17, 1
      %p35 = por %p33, %p34
      %p36 = scmp.ne.s32.totalorder %s25, %s26
      %p37 = scmp.eq.s32.totalorder %s17, 0
      %p38 = por %p36, %p37
      %p39 = scmp.ne.s32.totalorder %s25, %s26
      %p40 = scmp.eq.s32.totalorder %s18, 1
      %p41 = por %p39, %p40
      %p43 = scmp.ne.s32.totalorder %s26, %s42
      %p44 = scmp.eq.s32.totalorder %s18, 0
      %p45 = por %p43, %p44
      %s46 = ssub.s32 %s12, %s19
      %p47 = scmp.eq.s32.totalorder %s46, 0
      %s49 = sadd.s32 %s48, 1
      %s50 = scalar_select %p47, %s48, %s49
      %p53 = pneg %p47
      %p54 = scmp.eq.s32.totalorder %s12, 1
      %p55 = por %p53, %p54
      %p56 = scmp.ne.s32.totalorder %s48, %s51
      %p57 = scmp.eq.s32.totalorder %s12, 0
      %p58 = por %p56, %p57
      %p59 = scmp.ne.s32.totalorder %s48, %s51
      %p60 = scmp.eq.s32.totalorder %s17, 1
      %p61 = por %p59, %p60
      %p62 = scmp.ne.s32.totalorder %s51, %s52
      %p63 = scmp.eq.s32.totalorder %s17, 0
      %p64 = por %p62, %p63
      %p65 = scmp.ne.s32.totalorder %s51, %s52
      %p66 = scmp.eq.s32.totalorder %s18, 1
      %p67 = por %p65, %p66
      %p69 = scmp.ne.s32.totalorder %s52, %s68
      %p70 = scmp.eq.s32.totalorder %s18, 0
      %p71 = por %p69, %p70
      %s73 = sadd.s32 %s72, 1
      %p76 = scmp.eq.s32.totalorder %s12, 1
      %p77 = scmp.ne.s32.totalorder %s72, %s74
      %p78 = scmp.eq.s32.totalorder %s12, 0
      %p79 = por %p77, %p78
      %p80 = scmp.ne.s32.totalorder %s72, %s74
      %p81 = scmp.eq.s32.totalorder %s17, 1
      %p82 = por %p80, %p81
      %p83 = scmp.ne.s32.totalorder %s74, %s75
      %p84 = scmp.eq.s32.totalorder %s17, 0
      %p85 = por %p83, %p84
      %p86 = scmp.ne.s32.totalorder %s74, %s75
      %p87 = scmp.eq.s32.totalorder %s18, 1
      %p88 = por %p86, %p87
      %p90 = scmp.ne.s32.totalorder %s75, %s89
      %p91 = scmp.eq.s32.totalorder %s18, 0
      %p92 = por %p90, %p91
      %s94 = sadd.s32 %s93, 1
      %p97 = scmp.eq.s32.totalorder %s12, 1
      %p98 = scmp.ne.s32.totalorder %s93, %s95
      %p99 = scmp.eq.s32.totalorder %s12, 0
      %p100 = por %p98, %p99
      %p101 = scmp.ne.s32.totalorder %s93, %s95
      %p102 = scmp.eq.s32.totalorder %s17, 1
      %p103 = por %p101, %p102
      %p104 = scmp.ne.s32.totalorder %s95, %s96
      %p105 = scmp.eq.s32.totalorder %s17, 0
      %p106 = por %p104, %p105
      %p107 = scmp.ne.s32.totalorder %s95, %s96
      %p108 = scmp.eq.s32.totalorder %s18, 1
      %p109 = por %p107, %p108
      %p111 = scmp.ne.s32.totalorder %s96, %s110
      %p112 = scmp.eq.s32.totalorder %s18, 0
      %p113 = por %p111, %p112
      %s115 = sadd.s32 %s114, 1
      %p118 = scmp.eq.s32.totalorder %s12, 1
      %p119 = scmp.ne.s32.totalorder %s114, %s116
      %p120 = scmp.eq.s32.totalorder %s12, 0
      %p121 = por %p119, %p120
      %p122 = scmp.ne.s32.totalorder %s114, %s116
      %p123 = scmp.eq.s32.totalorder %s17, 1
      %p124 = por %p122, %p123
      %p125 = scmp.ne.s32.totalorder %s116, %s117
      %p126 = scmp.eq.s32.totalorder %s17, 0
      %p127 = por %p125, %p126
      %p128 = scmp.ne.s32.totalorder %s116, %s117
      %p129 = scmp.eq.s32.totalorder %s18, 1
      %p130 = por %p128, %p129
      %p132 = scmp.ne.s32.totalorder %s117, %s131
      %p133 = scmp.eq.s32.totalorder %s18, 0
      %p134 = por %p132, %p133
      %s136 = sadd.s32 %s135, 1
      %p139 = scmp.eq.s32.totalorder %s12, 1
      %p140 = scmp.ne.s32.totalorder %s135, %s137
      %p141 = scmp.eq.s32.totalorder %s12, 0
      %p142 = por %p140, %p141
      %p143 = scmp.ne.s32.totalorder %s135, %s137
      %p144 = scmp.eq.s32.totalorder %s17, 1
      %p145 = por %p143, %p144
      %p146 = scmp.ne.s32.totalorder %s137, %s138
      %p147 = scmp.eq.s32.totalorder %s17, 0
      %p148 = por %p146, %p147
      %p149 = scmp.ne.s32.totalorder %s137, %s138
      %p150 = scmp.eq.s32.totalorder %s18, 1
      %p151 = por %p149, %p150
      %p153 = scmp.ne.s32.totalorder %s138, %s152
      %p154 = scmp.eq.s32.totalorder %s18, 0
      %p155 = por %p153, %p154
      %p156 = scmp.le.s32.totalorder 1, %s12
      %p157 = scmp.lt.s32.totalorder %s12, 3
      %p158 = pnand %p156, %p157
      %p159 = pneg %p158
      // Predicated region
      $region9: #{mutual_information_loss.1} parent=5 // pred_check
        _
      $region10: #{mutual_information_loss.1} parent=5 // pred_check_branch
        %161 = sbr.rel (%p158) target = $region12
      $region11: #{mutual_information_loss.1} parent=5 // pred_region
        %s162 = ssub.s32 %s12, 1
        // Predicated region
        $region13: #{mutual_information_loss.1} parent=11 // pred_check
          %p163 = pneg %p85
        $region14: #{mutual_information_loss.1} parent=11 // pred_check_branch
          %165 = sbr.rel (%p163) target = $region16
        $region15: #{mutual_information_loss.1} parent=11 // pred_region
          _
        $region16: #{mutual_information_loss.1} parent=11 // pred_fallthru
          _
        // Predicated region
        $region17: #{mutual_information_loss.1} parent=11 // pred_check
          %p166 = pneg %p106
        $region18: #{mutual_information_loss.1} parent=11 // pred_check_branch
          %168 = sbr.rel (%p166) target = $region20
        $region19: #{mutual_information_loss.1} parent=11 // pred_region
          _
        $region20: #{mutual_information_loss.1} parent=11 // pred_fallthru
          _
        // Predicated region
        $region21: #{mutual_information_loss.1} parent=11 // pred_check
          %p169 = pneg %p127
        $region22: #{mutual_information_loss.1} parent=11 // pred_check_branch
          %171 = sbr.rel (%p169) target = $region24
        $region23: #{mutual_information_loss.1} parent=11 // pred_region
          _
        $region24: #{mutual_information_loss.1} parent=11 // pred_fallthru
          _
      $region12: #{mutual_information_loss.1} parent=5 // pred_fallthru
        _
      %p172 = scmp.lt.s32.totalorder %s12, 2
      // Predicated region
      $region25: #{mutual_information_loss.1} parent=5 // pred_check
        %p173 = pneg %p172
      $region26: #{mutual_information_loss.1} parent=5 // pred_check_branch
        %175 = sbr.rel (%p173) target = $region28
      $region27: #{mutual_information_loss.1} parent=5 // pred_region
        // Predicated region
        $region29: #{mutual_information_loss.1} parent=27 // pred_check
          %p176 = pneg %p32
        $region30: #{mutual_information_loss.1} parent=27 // pred_check_branch
          %178 = sbr.rel (%p176) target = $region32
        $region31: #{mutual_information_loss.1} parent=27 // pred_region
          %s179 = smul.u32 16, %s12
          %s180 = ssub.s32 25, %s179
          %p181 = scmp.lt.s32.totalorder %s180, 16
          %s182 = scalar_select %p181, %s180, 16
          %s183 = smul.u32 128, %s182
          %p184 = scmp.lt.s32.totalorder %s179, 24
          %s185 = scalar_select %p184, %s179, 24
          %s186 = smul.addr %s185, 8
          %s187 = scalar_lea.vmem %s0, %s186
          %s188 = smul.u32 16, %s12
          %s189 = ssub.s32 25, %s188
          %p190 = scmp.lt.s32.totalorder %s189, 16
          %s191 = scalar_select %p190, %s189, 16
          %s192 = smul.u32 128, %s191
        $region32: #{mutual_information_loss.1} parent=27 // pred_fallthru
          _
        // Predicated region
        $region33: #{mutual_information_loss.1} parent=27 // pred_check
          %p193 = pneg %p58
        $region34: #{mutual_information_loss.1} parent=27 // pred_check_branch
          %195 = sbr.rel (%p193) target = $region36
        $region35: #{mutual_information_loss.1} parent=27 // pred_region
          %s196 = smul.u32 16, %s12
          %s197 = ssub.s32 25, %s196
          %p198 = scmp.lt.s32.totalorder %s197, 16
          %s199 = scalar_select %p198, %s197, 16
          %s200 = smul.u32 128, %s199
          %p201 = scmp.lt.s32.totalorder %s196, 24
          %s202 = scalar_select %p201, %s196, 24
          %s203 = smul.addr %s202, 8
          %s204 = scalar_lea.vmem %s1, %s203
          %s205 = smul.u32 16, %s12
          %s206 = ssub.s32 25, %s205
          %p207 = scmp.lt.s32.totalorder %s206, 16
          %s208 = scalar_select %p207, %s206, 16
          %s209 = smul.u32 128, %s208
        $region36: #{mutual_information_loss.1} parent=27 // pred_fallthru
          _
      $region28: #{mutual_information_loss.1} parent=5 // pred_fallthru
        _
      %p210 = scmp.le.s32.totalorder 1, %s12
      %p211 = scmp.lt.s32.totalorder %s12, 3
      %p212 = pnand %p210, %p211
      %p213 = pneg %p212
      // Predicated region
      $region37: #{mutual_information_loss.1} parent=5 // pred_check
        _
      $region38: #{mutual_information_loss.1} parent=5 // pred_check_branch
        %215 = sbr.rel (%p212) target = $region40
      $region39: #{mutual_information_loss.1} parent=5 // pred_region
        %s216 = ssub.s32 %s12, 1
        %s217 = smul.u32 16, %s17
        %s218 = ssub.s32 25, %s217
        %p219 = scmp.lt.s32.totalorder %s218, 16
        %s220 = scalar_select %p219, %s218, 16
        %s221 = smul.u32 128, %s220
        %p222 = scmp.lt.s32.totalorder %s217, 24
        %s223 = scalar_select %p222, %s217, 24
        %s224 = smul.addr %s223, 8
        %s225 = scalar_lea.vmem %s0, %s224
        %p226 = pneg %p38
        %p227 = pneg %p35
        %s228 = smul.u32 16, %s17
        %s229 = ssub.s32 25, %s228
        %p230 = scmp.lt.s32.totalorder %s229, 16
        %s231 = scalar_select %p230, %s229, 16
        %s232 = smul.u32 128, %s231
        %p233 = scmp.lt.s32.totalorder %s228, 24
        %s234 = scalar_select %p233, %s228, 24
        %s235 = smul.addr %s234, 8
        %s236 = scalar_lea.vmem %s1, %s235
        %p237 = pneg %p64
        %p238 = pneg %p61
        %p239 = pneg %p85
        %p240 = pneg %p82
        %p241 = pneg %p106
        %p242 = pneg %p103
        %p243 = pneg %p127
        %p244 = pneg %p124
        %p245 = pneg %p148
        %p246 = pneg %p145
        %s247 = smul.u32 16, %s17
        %s248 = ssub.s32 25, %s247
        %p249 = scmp.lt.s32.totalorder %s248, 16
        %s250 = scalar_select %p249, %s248, 16
        %s251 = smul.u32 128, %s250
        %p252 = scmp.lt.s32.totalorder %s247, 24
        %s253 = scalar_select %p252, %s247, 24
        %s254 = smul.addr %s253, 8
        %s255 = scalar_lea.vmem %s0, %s254
        %s256 = smul.u32 16, %s17
        %s257 = ssub.s32 25, %s256
        %p258 = scmp.lt.s32.totalorder %s257, 16
        %s259 = scalar_select %p258, %s257, 16
        %s260 = smul.u32 128, %s259
        %s261 = smul.u32 16, %s17
        %s262 = ssub.s32 25, %s261
        %p263 = scmp.lt.s32.totalorder %s262, 16
        %s264 = scalar_select %p263, %s262, 16
        %s265 = smul.u32 128, %s264
        %p266 = scmp.lt.s32.totalorder %s261, 24
        %s267 = scalar_select %p266, %s261, 24
        %s268 = smul.addr %s267, 8
        %s269 = scalar_lea.vmem %s1, %s268
        %s270 = smul.u32 16, %s17
        %s271 = ssub.s32 25, %s270
        %p272 = scmp.lt.s32.totalorder %s271, 16
        %s273 = scalar_select %p272, %s271, 16
        %s274 = smul.u32 128, %s273
        %p275 = scmp.eq.s32.totalorder %s17, 0
        // Predicated region
        $region41: #{mutual_information_loss.1} parent=39 // pred_check
          %p276 = pneg %p275
        $region42: #{mutual_information_loss.1} parent=39 // pred_check_branch
          %278 = sbr.rel (%p276) target = $region44
        $region43: #{mutual_information_loss.1} parent=39 // pred_region
          %vm279 = vcmask 57344
          %280 = vst.msk [vmem:[#allocation2] sm:$0x1] %vm279, 0.0
        $region44: #{mutual_information_loss.1} parent=39 // pred_fallthru
          _
        %v281 = vld [vmem:[%s255] sm:$0xff]
        %v282 = vld [vmem:[%s255 + $0x8] sm:$0xff]
        %v283 = vld [vmem:[%s255 + $0x10] sm:$0xff]
        %v284 = vld [vmem:[%s255 + $0x18] sm:$0xff]
        %v285 = vld [vmem:[%s255 + $0x20] sm:$0xff]
        %v286 = vld [vmem:[%s255 + $0x28] sm:$0xff]
        %v287 = vld [vmem:[%s255 + $0x30] sm:$0xff]
        %v288 = vld [vmem:[%s255 + $0x38] sm:$0xff]
        %v289 = vld [vmem:[%s255 + $0x40] sm:$0xff]
        %v290 = vld [vmem:[%s255 + $0x48] sm:$0xff]
        %v291 = vld [vmem:[%s255 + $0x50] sm:$0xff]
        %v292 = vld [vmem:[%s255 + $0x58] sm:$0xff]
        %v293 = vld [vmem:[%s255 + $0x60] sm:$0xff]
        %v294 = vld [vmem:[%s255 + $0x68] sm:$0xff]
        %v295 = vld [vmem:[%s255 + $0x70] sm:$0xff]
        %v296 = vld [vmem:[%s255 + $0x78] sm:$0xff]
        %v297 = vld [vmem:[%s269] sm:$0xff]
        %v298 = vld [vmem:[%s269 + $0x8] sm:$0xff]
        %v299 = vld [vmem:[%s269 + $0x10] sm:$0xff]
        %v300 = vld [vmem:[%s269 + $0x18] sm:$0xff]
        %v301 = vld [vmem:[%s269 + $0x20] sm:$0xff]
        %v302 = vld [vmem:[%s269 + $0x28] sm:$0xff]
        %v303 = vld [vmem:[%s269 + $0x30] sm:$0xff]
        %v304 = vld [vmem:[%s269 + $0x38] sm:$0xff]
        %v305 = vld [vmem:[%s269 + $0x40] sm:$0xff]
        %v306 = vld [vmem:[%s269 + $0x48] sm:$0xff]
        %v307 = vld [vmem:[%s269 + $0x50] sm:$0xff]
        %v308 = vld [vmem:[%s269 + $0x58] sm:$0xff]
        %v309 = vld [vmem:[%s269 + $0x60] sm:$0xff]
        %v310 = vld [vmem:[%s269 + $0x68] sm:$0xff]
        %v311 = vld [vmem:[%s269 + $0x70] sm:$0xff]
        %v312 = vld [vmem:[%s269 + $0x78] sm:$0xff]
        %v313 = vld [vmem:[%s2] sm:$0xff]
        %v314 = vld [vmem:[%s2 + $0x8] sm:$0xff]
        %v315 = vld [vmem:[%s3] sm:$0xff]
        %v316 = vld [vmem:[%s3 + $0x8] sm:$0xff]
        %v317 = vld [vmem:[%s3 + $0x10] sm:$0xff]
        %v318 = vld [vmem:[%s3 + $0x18] sm:$0xff]
        %v319 = vld [vmem:[%s3 + $0x20] sm:$0xff]
        %v320 = vld [vmem:[%s3 + $0x28] sm:$0xff]
        %v321 = vld [vmem:[%s3 + $0x30] sm:$0xff]
        %v322 = vld [vmem:[%s3 + $0x38] sm:$0xff]
        %v323 = vld [vmem:[%s4] sm:$0xf]
        %v324 = vlaneseq
        %v325 = vshrl.u32 %v324, 7
        %v326 = vsub.s32 0, %v325
        %v327 = vrot.slane %v323, %v326
        %vm328 = vcmask 130048
        %v330 = vsel %vm328, %v281, 0
        %v333 = vsel %vm328, %v282, 0
        %v336 = vsel %vm328, %v283, 0
        %v339 = vsel %vm328, %v284, 0
        %v342 = vsel %vm328, %v285, 0
        %v345 = vsel %vm328, %v286, 0
        %v348 = vsel %vm328, %v287, 0
        %v351 = vsel %vm328, %v288, 0
        %v354 = vsel %vm328, %v289, 0
        %v357 = vsel %vm328, %v290, 0
        %v360 = vsel %vm328, %v291, 0
        %v363 = vsel %vm328, %v292, 0
        %v366 = vsel %vm328, %v293, 0
        %v369 = vsel %vm328, %v294, 0
        %v372 = vsel %vm328, %v295, 0
        %v375 = vsel %vm328, %v296, 0
        %377 = vmatprep.subr.mxu0 0.0
        %378 = vmatpush1.msra.mxu0 %v313
        %379 = vmatprep.subr.mxu0 0.0
        %380 = vmatpush1.msra.mxu0 %v314
        %381 = vmatprep.subr.mxu0 0.0
        %382 = vmatpush1.msra.mxu0 0.0
        %383 = vmatprep.subr.mxu0 0.0
        %384 = vmatpush1.msra.mxu0 0.0
        %385 = vmatprep.subr.mxu0 0.0
        %386 = vmatpush1.msra.mxu0 0.0
        %387 = vmatprep.subr.mxu0 0.0
        %388 = vmatpush1.msra.mxu0 0.0
        %389 = vmatprep.subr.mxu0 0.0
        %390 = vmatpush1.msra.mxu0 0.0
        %391 = vmatprep.subr.mxu0 0.0
        %392 = vmatpush1.msra.mxu0 0.0
        %393 = vmatprep.subr.mxu0 0.0
        %394 = vmatpush1.msra.mxu0 0.0
        %395 = vmatprep.subr.mxu0 0.0
        %396 = vmatpush1.msra.mxu0 0.0
        %397 = vmatprep.subr.mxu0 0.0
        %398 = vmatpush1.msra.mxu0 0.0
        %399 = vmatprep.subr.mxu0 0.0
        %400 = vmatpush1.msra.mxu0 0.0
        %401 = vmatprep.subr.mxu0 0.0
        %402 = vmatpush1.msra.mxu0 0.0
        %403 = vmatprep.subr.mxu0 0.0
        %404 = vmatpush1.msra.mxu0 0.0
        %405 = vmatprep.subr.mxu0 0.0
        %406 = vmatpush1.msra.mxu0 0.0
        %407 = vmatprep.subr.mxu0 0.0
        %408 = vmatpush1.msra.mxu0 0.0
        %409 = vmatprep.subr.mxu0 0.0
        %410 = vmatpush1.msra.mxu0 0.0
        %411 = vmatprep.subr.mxu0 0.0
        %412 = vmatpush1.msra.mxu0 0.0
        %413 = vmatprep.subr.mxu0 0.0
        %414 = vmatpush1.msra.mxu0 0.0
        %415 = vmatprep.subr.mxu0 0.0
        %416 = vmatpush1.msra.mxu0 0.0
        %417 = vmatprep.subr.mxu0 0.0
        %418 = vmatpush1.msra.mxu0 0.0
        %419 = vmatprep.subr.mxu0 0.0
        %420 = vmatpush1.msra.mxu0 0.0
        %421 = vmatprep.subr.mxu0 0.0
        %422 = vmatpush1.msra.mxu0 0.0
        %423 = vmatprep.subr.mxu0 0.0
        %424 = vmatpush1.msra.mxu0 0.0
        %425 = vmatprep.subr.mxu0 0.0
        %426 = vmatpush1.msra.mxu0 0.0
        %427 = vmatprep.subr.mxu0 0.0
        %428 = vmatpush1.msra.mxu0 0.0
        %429 = vmatprep.subr.mxu0 0.0
        %430 = vmatpush1.msra.mxu0 0.0
        %431 = vmatprep.subr.mxu0 0.0
        %432 = vmatpush1.msra.mxu0 0.0
        %433 = vmatprep.subr.mxu0 0.0
        %434 = vmatpush1.msra.mxu0 0.0
        %435 = vmatprep.subr.mxu0 0.0
        %436 = vmatpush1.msra.mxu0 0.0
        %437 = vmatprep.subr.mxu0 0.0
        %438 = vmatpush1.msra.mxu0 0.0
        %439 = vmatprep.subr.mxu0 0.0
        %440 = vmatpush1.msra.mxu0 0.0
        %441 = vmatprep.mubr.f32.mxu0 0.0
        %442 = vmatmul.mubr.f32.gmra.mrb[0].mxu0 %v330
        %v443 = vpop.f32.mrb[0].mxu0
        %v444 = vadd.f32 %v327, %v443
        %v445 = vpop.f32.mrb[0].mxu0
        %446 = vmatprep.mubr.f32.mxu0 0.0
        %447 = vmatmul.mubr.f32.gmra.mrb[0].mxu0 %v333
        %v448 = vpop.f32.mrb[0].mxu0
        %v449 = vadd.f32 %v327, %v448
        %v450 = vpop.f32.mrb[0].mxu0
        %451 = vmatprep.mubr.f32.mxu0 0.0
        %452 = vmatmul.mubr.f32.gmra.mrb[0].mxu0 %v336
        %v453 = vpop.f32.mrb[0].mxu0
        %v454 = vadd.f32 %v327, %v453
        %v455 = vpop.f32.mrb[0].mxu0
        %456 = vmatprep.mubr.f32.mxu0 0.0
        %457 = vmatmul.mubr.f32.gmra.mrb[0].mxu0 %v339
        %v458 = vpop.f32.mrb[0].mxu0
        %v459 = vadd.f32 %v327, %v458
        %v460 = vpop.f32.mrb[0].mxu0
        %461 = vmatprep.mubr.f32.mxu0 0.0
        %462 = vmatmul.mubr.f32.gmra.mrb[0].mxu0 %v342
        %v463 = vpop.f32.mrb[0].mxu0
        %v464 = vadd.f32 %v327, %v463
        %v465 = vpop.f32.mrb[0].mxu0
        %466 = vmatprep.mubr.f32.mxu0 0.0
        %467 = vmatmul.mubr.f32.gmra.mrb[0].mxu0 %v345
        %v468 = vpop.f32.mrb[0].mxu0
        %v469 = vadd.f32 %v327, %v468
        %v470 = vpop.f32.mrb[0].mxu0
        %471 = vmatprep.mubr.f32.mxu0 0.0
        %472 = vmatmul.mubr.f32.gmra.mrb[0].mxu0 %v348
        %v473 = vpop.f32.mrb[0].mxu0
        %v474 = vadd.f32 %v327, %v473
        %v475 = vpop.f32.mrb[0].mxu0
        %476 = vmatprep.mubr.f32.mxu0 0.0
        %477 = vmatmul.mubr.f32.gmra.mrb[0].mxu0 %v351
        %v478 = vpop.f32.mrb[0].mxu0
        %v479 = vadd.f32 %v327, %v478
        %v480 = vpop.f32.mrb[0].mxu0
        %481 = vmatprep.mubr.f32.mxu0 0.0
        %482 = vmatmul.mubr.f32.gmra.mrb[0].mxu0 %v354
        %v483 = vpop.f32.mrb[0].mxu0
        %v484 = vadd.f32 %v327, %v483
        %v485 = vpop.f32.mrb[0].mxu0
        %486 = vmatprep.mubr.f32.mxu0 0.0
        %487 = vmatmul.mubr.f32.gmra.mrb[0].mxu0 %v357
        %v488 = vpop.f32.mrb[0].mxu0
        %v489 = vadd.f32 %v327, %v488
        %v490 = vpop.f32.mrb[0].mxu0
        %491 = vmatprep.mubr.f32.mxu0 0.0
        %492 = vmatmul.mubr.f32.gmra.mrb[0].mxu0 %v360
        %v493 = vpop.f32.mrb[0].mxu0
        %v494 = vadd.f32 %v327, %v493
        %v495 = vpop.f32.mrb[0].mxu0
        %496 = vmatprep.mubr.f32.mxu0 0.0
        %497 = vmatmul.mubr.f32.gmra.mrb[0].mxu0 %v363
        %v498 = vpop.f32.mrb[0].mxu0
        %v499 = vadd.f32 %v327, %v498
        %v500 = vpop.f32.mrb[0].mxu0
        %501 = vmatprep.mubr.f32.mxu0 0.0
        %502 = vmatmul.mubr.f32.gmra.mrb[0].mxu0 %v366
        %v503 = vpop.f32.mrb[0].mxu0
        %v504 = vadd.f32 %v327, %v503
        %v505 = vpop.f32.mrb[0].mxu0
        %506 = vmatprep.mubr.f32.mxu0 0.0
        %507 = vmatmul.mubr.f32.gmra.mrb[0].mxu0 %v369
        %v508 = vpop.f32.mrb[0].mxu0
        %v509 = vadd.f32 %v327, %v508
        %v510 = vpop.f32.mrb[0].mxu0
        %511 = vmatprep.mubr.f32.mxu0 0.0
        %512 = vmatmul.mubr.f32.gmra.mrb[0].mxu0 %v372
        %v513 = vpop.f32.mrb[0].mxu0
        %v514 = vadd.f32 %v327, %v513
        %v515 = vpop.f32.mrb[0].mxu0
        %516 = vmatprep.mubr.f32.mxu0 0.0
        %517 = vmatmul.mubr.f32.gmra.mrb[0].mxu0 %v375
        %v518 = vpop.f32.mrb[0].mxu0
        %v519 = vadd.f32 %v327, %v518
        %v520 = vpop.f32.mrb[0].mxu0
        %521 = vdwg.mxu0
        %v522 = vmax.f32 %v444, 0.0
        %v523 = vmax.f32 %v449, 0.0
        %v524 = vmax.f32 %v454, 0.0
        %v525 = vmax.f32 %v459, 0.0
        %v526 = vmax.f32 %v464, 0.0
        %v527 = vmax.f32 %v469, 0.0
        %v528 = vmax.f32 %v474, 0.0
        %v529 = vmax.f32 %v479, 0.0
        %v530 = vmax.f32 %v484, 0.0
        %v531 = vmax.f32 %v489, 0.0
        %v532 = vmax.f32 %v494, 0.0
        %v533 = vmax.f32 %v499, 0.0
        %v534 = vmax.f32 %v504, 0.0
        %v535 = vmax.f32 %v509, 0.0
        %v536 = vmax.f32 %v514, 0.0
        %v537 = vmax.f32 %v519, 0.0
        %v538 = vlaneseq
        %v539 = vshrl.u32 %v538, 7
        %v540 = vsub.s32 1, %v539
        %v541 = vrot.slane %v323, %v540
        %vm542 = vcmask 523264
        %v544 = vsel %vm542, %v522, 0
        %v547 = vsel %vm542, %v523, 0
        %v550 = vsel %vm542, %v524, 0
        %v553 = vsel %vm542, %v525, 0
        %v556 = vsel %vm542, %v526, 0
        %v559 = vsel %vm542, %v527, 0
        %v562 = vsel %vm542, %v528, 0
        %v565 = vsel %vm542, %v529, 0
        %v568 = vsel %vm542, %v530, 0
        %v571 = vsel %vm542, %v531, 0
        %v574 = vsel %vm542, %v532, 0
        %v577 = vsel %vm542, %v533, 0
        %v580 = vsel %vm542, %v534, 0
        %v583 = vsel %vm542, %v535, 0
        %v586 = vsel %vm542, %v536, 0
        %v589 = vsel %vm542, %v537, 0
        %591 = vmatprep.subr.mxu0 0.0
        %592 = vmatpush1.msra.mxu0 %v315
        %593 = vmatprep.subr.mxu0 0.0
        %594 = vmatpush1.msra.mxu0 %v316
        %595 = vmatprep.subr.mxu0 0.0
        %596 = vmatpush1.msra.mxu0 %v317
        %597 = vmatprep.subr.mxu0 0.0
        %598 = vmatpush1.msra.mxu0 %v318
        %599 = vmatprep.subr.mxu0 0.0
        %600 = vmatpush1.msra.mxu0 %v319
        %601 = vmatprep.subr.mxu0 0.0
        %602 = vmatpush1.msra.mxu0 %v320
        %603 = vmatprep.subr.mxu0 0.0
        %604 = vmatpush1.msra.mxu0 %v321
        %605 = vmatprep.subr.mxu0 0.0
        %606 = vmatpush1.msra.mxu0 %v322
        %607 = vmatprep.subr.mxu0 0.0
        %608 = vmatpush1.msra.mxu0 0.0
        %609 = vmatprep.subr.mxu0 0.0
        %610 = vmatpush1.msra.mxu0 0.0
        %611 = vmatprep.subr.mxu0 0.0
        %612 = vmatpush1.msra.mxu0 0.0
        %613 = vmatprep.subr.mxu0 0.0
        %614 = vmatpush1.msra.mxu0 0.0
        %615 = vmatprep.subr.mxu0 0.0
        %616 = vmatpush1.msra.mxu0 0.0
        %617 = vmatprep.subr.mxu0 0.0
        %618 = vmatpush1.msra.mxu0 0.0
        %619 = vmatprep.subr.mxu0 0.0
        %620 = vmatpush1.msra.mxu0 0.0
        %621 = vmatprep.subr.mxu0 0.0
        %622 = vmatpush1.msra.mxu0 0.0
        %623 = vmatprep.subr.mxu0 0.0
        %624 = vmatpush1.msra.mxu0 0.0
        %625 = vmatprep.subr.mxu0 0.0
        %626 = vmatpush1.msra.mxu0 0.0
        %627 = vmatprep.subr.mxu0 0.0
        %628 = vmatpush1.msra.mxu0 0.0
        %629 = vmatprep.subr.mxu0 0.0
        %630 = vmatpush1.msra.mxu0 0.0
        %631 = vmatprep.subr.mxu0 0.0
        %632 = vmatpush1.msra.mxu0 0.0
        %633 = vmatprep.subr.mxu0 0.0
        %634 = vmatpush1.msra.mxu0 0.0
        %635 = vmatprep.subr.mxu0 0.0
        %636 = vmatpush1.msra.mxu0 0.0
        %637 = vmatprep.subr.mxu0 0.0
        %638 = vmatpush1.msra.mxu0 0.0
        %639 = vmatprep.subr.mxu0 0.0
        %640 = vmatpush1.msra.mxu0 0.0
        %641 = vmatprep.subr.mxu0 0.0
        %642 = vmatpush1.msra.mxu0 0.0
        %643 = vmatprep.subr.mxu0 0.0
        %644 = vmatpush1.msra.mxu0 0.0
        %645 = vmatprep.subr.mxu0 0.0
        %646 = vmatpush1.msra.mxu0 0.0
        %647 = vmatprep.subr.mxu0 0.0
        %648 = vmatpush1.msra.mxu0 0.0
        %649 = vmatprep.subr.mxu0 0.0
        %650 = vmatpush1.msra.mxu0 0.0
        %651 = vmatprep.subr.mxu0 0.0
        %652 = vmatpush1.msra.mxu0 0.0
        %653 = vmatprep.subr.mxu0 0.0
        %654 = vmatpush1.msra.mxu0 0.0
        %655 = vmatprep.mubr.f32.mxu0 0.0
        %656 = vmatmul.mubr.f32.gmra.mrb[0].mxu0 %v544
        %v657 = vpop.f32.mrb[0].mxu0
        %v658 = vadd.f32 %v541, %v657
        %v659 = vpop.f32.mrb[0].mxu0
        %660 = vmatprep.mubr.f32.mxu0 0.0
        %661 = vmatmul.mubr.f32.gmra.mrb[0].mxu0 %v547
        %v662 = vpop.f32.mrb[0].mxu0
        %v663 = vadd.f32 %v541, %v662
        %v664 = vpop.f32.mrb[0].mxu0
        %665 = vmatprep.mubr.f32.mxu0 0.0
        %666 = vmatmul.mubr.f32.gmra.mrb[0].mxu0 %v550
        %v667 = vpop.f32.mrb[0].mxu0
        %v668 = vadd.f32 %v541, %v667
        %v669 = vpop.f32.mrb[0].mxu0
        %670 = vmatprep.mubr.f32.mxu0 0.0
        %671 = vmatmul.mubr.f32.gmra.mrb[0].mxu0 %v553
        %v672 = vpop.f32.mrb[0].mxu0
        %v673 = vadd.f32 %v541, %v672
        %v674 = vpop.f32.mrb[0].mxu0
        %675 = vmatprep.mubr.f32.mxu0 0.0
        %676 = vmatmul.mubr.f32.gmra.mrb[0].mxu0 %v556
        %v677 = vpop.f32.mrb[0].mxu0
        %v678 = vadd.f32 %v541, %v677
        %v679 = vpop.f32.mrb[0].mxu0
        %680 = vmatprep.mubr.f32.mxu0 0.0
        %681 = vmatmul.mubr.f32.gmra.mrb[0].mxu0 %v559
        %v682 = vpop.f32.mrb[0].mxu0
        %v683 = vadd.f32 %v541, %v682
        %v684 = vpop.f32.mrb[0].mxu0
        %685 = vmatprep.mubr.f32.mxu0 0.0
        %686 = vmatmul.mubr.f32.gmra.mrb[0].mxu0 %v562
        %v687 = vpop.f32.mrb[0].mxu0
        %v688 = vadd.f32 %v541, %v687
        %v689 = vpop.f32.mrb[0].mxu0
        %690 = vmatprep.mubr.f32.mxu0 0.0
        %691 = vmatmul.mubr.f32.gmra.mrb[0].mxu0 %v565
        %v692 = vpop.f32.mrb[0].mxu0
        %v693 = vadd.f32 %v541, %v692
        %v694 = vpop.f32.mrb[0].mxu0
        %695 = vmatprep.mubr.f32.mxu0 0.0
        %696 = vmatmul.mubr.f32.gmra.mrb[0].mxu0 %v568
        %v697 = vpop.f32.mrb[0].mxu0
        %v698 = vadd.f32 %v541, %v697
        %v699 = vpop.f32.mrb[0].mxu0
        %700 = vmatprep.mubr.f32.mxu0 0.0
        %701 = vmatmul.mubr.f32.gmra.mrb[0].mxu0 %v571
        %v702 = vpop.f32.mrb[0].mxu0
        %v703 = vadd.f32 %v541, %v702
        %v704 = vpop.f32.mrb[0].mxu0
        %705 = vmatprep.mubr.f32.mxu0 0.0
        %706 = vmatmul.mubr.f32.gmra.mrb[0].mxu0 %v574
        %v707 = vpop.f32.mrb[0].mxu0
        %v708 = vadd.f32 %v541, %v707
        %v709 = vpop.f32.mrb[0].mxu0
        %710 = vmatprep.mubr.f32.mxu0 0.0
        %711 = vmatmul.mubr.f32.gmra.mrb[0].mxu0 %v577
        %v712 = vpop.f32.mrb[0].mxu0
        %v713 = vadd.f32 %v541, %v712
        %v714 = vpop.f32.mrb[0].mxu0
        %715 = vmatprep.mubr.f32.mxu0 0.0
        %716 = vmatmul.mubr.f32.gmra.mrb[0].mxu0 %v580
        %v717 = vpop.f32.mrb[0].mxu0
        %v718 = vadd.f32 %v541, %v717
        %v719 = vpop.f32.mrb[0].mxu0
        %720 = vmatprep.mubr.f32.mxu0 0.0
        %721 = vmatmul.mubr.f32.gmra.mrb[0].mxu0 %v583
        %v722 = vpop.f32.mrb[0].mxu0
        %v723 = vadd.f32 %v541, %v722
        %v724 = vpop.f32.mrb[0].mxu0
        %725 = vmatprep.mubr.f32.mxu0 0.0
        %726 = vmatmul.mubr.f32.gmra.mrb[0].mxu0 %v586
        %v727 = vpop.f32.mrb[0].mxu0
        %v728 = vadd.f32 %v541, %v727
        %v729 = vpop.f32.mrb[0].mxu0
        %730 = vmatprep.mubr.f32.mxu0 0.0
        %731 = vmatmul.mubr.f32.gmra.mrb[0].mxu0 %v589
        %v732 = vpop.f32.mrb[0].mxu0
        %v733 = vadd.f32 %v541, %v732
        %v734 = vpop.f32.mrb[0].mxu0
        %735 = vdwg.mxu0
        %v736 = vtanh.pop %v658
        %v737 = vtanh.pop %v663
        %v738 = vtanh.pop %v668
        %v739 = vtanh.pop %v673
        %v740 = vtanh.pop %v678
        %v741 = vtanh.pop %v683
        %v742 = vtanh.pop %v688
        %v743 = vtanh.pop %v693
        %v744 = vtanh.pop %v698
        %v745 = vtanh.pop %v703
        %v746 = vtanh.pop %v708
        %v747 = vtanh.pop %v713
        %v748 = vtanh.pop %v718
        %v749 = vtanh.pop %v723
        %v750 = vtanh.pop %v728
        %v751 = vtanh.pop %v733
        %v752 = vsub.f32 0.0, %v736
        %v753 = vsub.f32 0.0, %v737
        %v754 = vsub.f32 0.0, %v738
        %v755 = vsub.f32 0.0, %v739
        %v756 = vsub.f32 0.0, %v740
        %v757 = vsub.f32 0.0, %v741
        %v758 = vsub.f32 0.0, %v742
        %v759 = vsub.f32 0.0, %v743
        %v760 = vsub.f32 0.0, %v744
        %v761 = vsub.f32 0.0, %v745
        %v762 = vsub.f32 0.0, %v746
        %v763 = vsub.f32 0.0, %v747
        %v764 = vsub.f32 0.0, %v748
        %v765 = vsub.f32 0.0, %v749
        %v766 = vsub.f32 0.0, %v750
        %v767 = vsub.f32 0.0, %v751
        %v768 = vmul.f32 %v752, 1.442695
        %v769 = vpow.pop %v768
        %v770 = vmul.f32 %v753, 1.442695
        %v771 = vpow.pop %v770
        %v772 = vmul.f32 %v754, 1.442695
        %v773 = vpow.pop %v772
        %v774 = vmul.f32 %v755, 1.442695
        %v775 = vpow.pop %v774
        %v776 = vmul.f32 %v756, 1.442695
        %v777 = vpow.pop %v776
        %v778 = vmul.f32 %v757, 1.442695
        %v779 = vpow.pop %v778
        %v780 = vmul.f32 %v758, 1.442695
        %v781 = vpow.pop %v780
        %v782 = vmul.f32 %v759, 1.442695
        %v783 = vpow.pop %v782
        %v784 = vmul.f32 %v760, 1.442695
        %v785 = vpow.pop %v784
        %v786 = vmul.f32 %v761, 1.442695
        %v787 = vpow.pop %v786
        %v788 = vmul.f32 %v762, 1.442695
        %v789 = vpow.pop %v788
        %v790 = vmul.f32 %v763, 1.442695
        %v791 = vpow.pop %v790
        %v792 = vmul.f32 %v764, 1.442695
        %v793 = vpow.pop %v792
        %v794 = vmul.f32 %v765, 1.442695
        %v795 = vpow.pop %v794
        %v796 = vmul.f32 %v766, 1.442695
        %v797 = vpow.pop %v796
        %v798 = vmul.f32 %v767, 1.442695
        %v799 = vpow.pop %v798
        %v800 = vmul.f32 %v769, 0.5
        %v801 = vmul.f32 %v771, 0.5
        %v802 = vmul.f32 %v773, 0.5
        %v803 = vmul.f32 %v775, 0.5
        %v804 = vmul.f32 %v777, 0.5
        %v805 = vmul.f32 %v779, 0.5
        %v806 = vmul.f32 %v781, 0.5
        %v807 = vmul.f32 %v783, 0.5
        %v808 = vmul.f32 %v785, 0.5
        %v809 = vmul.f32 %v787, 0.5
        %v810 = vmul.f32 %v789, 0.5
        %v811 = vmul.f32 %v791, 0.5
        %v812 = vmul.f32 %v793, 0.5
        %v813 = vmul.f32 %v795, 0.5
        %v814 = vmul.f32 %v797, 0.5
        %v815 = vmul.f32 %v799, 0.5
        %v816 = vsub.f32 %v658, %v297
        %v817 = vsub.f32 %v663, %v298
        %v818 = vsub.f32 %v668, %v299
        %v819 = vsub.f32 %v673, %v300
        %v820 = vsub.f32 %v678, %v301
        %v821 = vsub.f32 %v683, %v302
        %v822 = vsub.f32 %v688, %v303
        %v823 = vsub.f32 %v693, %v304
        %v824 = vsub.f32 %v698, %v305
        %v825 = vsub.f32 %v703, %v306
        %v826 = vsub.f32 %v708, %v307
        %v827 = vsub.f32 %v713, %v308
        %v828 = vsub.f32 %v718, %v309
        %v829 = vsub.f32 %v723, %v310
        %v830 = vsub.f32 %v728, %v311
        %v831 = vsub.f32 %v733, %v312
        %v832 = vmul.f32 %v816, %v816
        %v833 = vmul.f32 %v817, %v817
        %v834 = vmul.f32 %v818, %v818
        %v835 = vmul.f32 %v819, %v819
        %v836 = vmul.f32 %v820, %v820
        %v837 = vmul.f32 %v821, %v821
        %v838 = vmul.f32 %v822, %v822
        %v839 = vmul.f32 %v823, %v823
        %v840 = vmul.f32 %v824, %v824
        %v841 = vmul.f32 %v825, %v825
        %v842 = vmul.f32 %v826, %v826
        %v843 = vmul.f32 %v827, %v827
        %v844 = vmul.f32 %v828, %v828
        %v845 = vmul.f32 %v829, %v829
        %v846 = vmul.f32 %v830, %v830
        %v847 = vmul.f32 %v831, %v831
        %v848 = vmul.f32 %v658, 2.0
        %v849 = vmul.f32 %v663, 2.0
        %v850 = vmul.f32 %v668, 2.0
        %v851 = vmul.f32 %v673, 2.0
        %v852 = vmul.f32 %v678, 2.0
        %v853 = vmul.f32 %v683, 2.0
        %v854 = vmul.f32 %v688, 2.0
        %v855 = vmul.f32 %v693, 2.0
        %v856 = vmul.f32 %v698, 2.0
        %v857 = vmul.f32 %v703, 2.0
        %v858 = vmul.f32 %v708, 2.0
        %v859 = vmul.f32 %v713, 2.0
        %v860 = vmul.f32 %v718, 2.0
        %v861 = vmul.f32 %v723, 2.0
        %v862 = vmul.f32 %v728, 2.0
        %v863 = vmul.f32 %v733, 2.0
        %v864 = vlaneseq
        %v865 = vshrl.u32 %v864, 7
        %v866 = vsub.s32 2, %v865
        %v867 = vrot.slane %v323, %v866
        %v868 = vmul.f32 %v848, %v867
        %v869 = vmul.f32 %v849, %v867
        %v870 = vmul.f32 %v850, %v867
        %v871 = vmul.f32 %v851, %v867
        %v872 = vmul.f32 %v852, %v867
        %v873 = vmul.f32 %v853, %v867
        %v874 = vmul.f32 %v854, %v867
        %v875 = vmul.f32 %v855, %v867
        %v876 = vmul.f32 %v856, %v867
        %v877 = vmul.f32 %v857, %v867
        %v878 = vmul.f32 %v858, %v867
        %v879 = vmul.f32 %v859, %v867
        %v880 = vmul.f32 %v860, %v867
        %v881 = vmul.f32 %v861, %v867
        %v882 = vmul.f32 %v862, %v867
        %v883 = vmul.f32 %v863, %v867
        %v884 = vlaneseq
        %v885 = vshrl.u32 %v884, 7
        %v886 = vsub.s32 3, %v885
        %v887 = vrot.slane %v323, %v886
        %v888 = vsub.f32 %v887, %v868
        %v889 = vsub.f32 %v887, %v869
        %v890 = vsub.f32 %v887, %v870
        %v891 = vsub.f32 %v887, %v871
        %v892 = vsub.f32 %v887, %v872
        %v893 = vsub.f32 %v887, %v873
        %v894 = vsub.f32 %v887, %v874
        %v895 = vsub.f32 %v887, %v875
        %v896 = vsub.f32 %v887, %v876
        %v897 = vsub.f32 %v887, %v877
        %v898 = vsub.f32 %v887, %v878
        %v899 = vsub.f32 %v887, %v879
        %v900 = vsub.f32 %v887, %v880
        %v901 = vsub.f32 %v887, %v881
        %v902 = vsub.f32 %v887, %v882
        %v903 = vsub.f32 %v887, %v883
        %v904 = vmul.f32 %v658, %v658
        %v905 = vmul.f32 %v663, %v663
        %v906 = vmul.f32 %v668, %v668
        %v907 = vmul.f32 %v673, %v673
        %v908 = vmul.f32 %v678, %v678
        %v909 = vmul.f32 %v683, %v683
        %v910 = vmul.f32 %v688, %v688
        %v911 = vmul.f32 %v693, %v693
        %v912 = vmul.f32 %v698, %v698
        %v913 = vmul.f32 %v703, %v703
        %v914 = vmul.f32 %v708, %v708
        %v915 = vmul.f32 %v713, %v713
        %v916 = vmul.f32 %v718, %v718
        %v917 = vmul.f32 %v723, %v723
        %v918 = vmul.f32 %v728, %v728
        %v919 = vmul.f32 %v733, %v733
        %v920 = vadd.f32 %v888, %v904
        %v921 = vadd.f32 %v889, %v905
        %v922 = vadd.f32 %v890, %v906
        %v923 = vadd.f32 %v891, %v907
        %v924 = vadd.f32 %v892, %v908
        %v925 = vadd.f32 %v893, %v909
        %v926 = vadd.f32 %v894, %v910
        %v927 = vadd.f32 %v895, %v911
        %v928 = vadd.f32 %v896, %v912
        %v929 = vadd.f32 %v897, %v913
        %v930 = vadd.f32 %v898, %v914
        %v931 = vadd.f32 %v899, %v915
        %v932 = vadd.f32 %v900, %v916
        %v933 = vadd.f32 %v901, %v917
        %v934 = vadd.f32 %v902, %v918
        %v935 = vadd.f32 %v903, %v919
        %v936 = vsub.f32 %v920, %v832
        %v937 = vsub.f32 %v921, %v833
        %v938 = vsub.f32 %v922, %v834
        %v939 = vsub.f32 %v923, %v835
        %v940 = vsub.f32 %v924, %v836
        %v941 = vsub.f32 %v925, %v837
        %v942 = vsub.f32 %v926, %v838
        %v943 = vsub.f32 %v927, %v839
        %v944 = vsub.f32 %v928, %v840
        %v945 = vsub.f32 %v929, %v841
        %v946 = vsub.f32 %v930, %v842
        %v947 = vsub.f32 %v931, %v843
        %v948 = vsub.f32 %v932, %v844
        %v949 = vsub.f32 %v933, %v845
        %v950 = vsub.f32 %v934, %v846
        %v951 = vsub.f32 %v935, %v847
        %968 = vrot.lane.b32.xlu0 %v800, 120
        %v969 = vpop.permute.xlu0 %968
        %970 = vrot.lane.b32.xlu0 %v801, 120
        %v971 = vpop.permute.xlu0 %970
        %972 = vrot.lane.b32.xlu0 %v802, 120
        %v973 = vpop.permute.xlu0 %972
        %974 = vrot.lane.b32.xlu0 %v803, 120
        %v975 = vpop.permute.xlu0 %974
        %976 = vrot.lane.b32.xlu0 %v804, 120
        %v977 = vpop.permute.xlu0 %976
        %978 = vrot.lane.b32.xlu0 %v805, 120
        %v979 = vpop.permute.xlu0 %978
        %980 = vrot.lane.b32.xlu0 %v806, 120
        %v981 = vpop.permute.xlu0 %980
        %982 = vrot.lane.b32.xlu0 %v807, 120
        %v983 = vpop.permute.xlu0 %982
        %984 = vrot.lane.b32.xlu0 %v808, 120
        %v985 = vpop.permute.xlu0 %984
        %986 = vrot.lane.b32.xlu0 %v809, 120
        %v987 = vpop.permute.xlu0 %986
        %988 = vrot.lane.b32.xlu0 %v810, 120
        %v989 = vpop.permute.xlu0 %988
        %990 = vrot.lane.b32.xlu0 %v811, 120
        %v991 = vpop.permute.xlu0 %990
        %992 = vrot.lane.b32.xlu0 %v812, 120
        %v993 = vpop.permute.xlu0 %992
        %994 = vrot.lane.b32.xlu0 %v813, 120
        %v995 = vpop.permute.xlu0 %994
        %996 = vrot.lane.b32.xlu0 %v814, 120
        %v997 = vpop.permute.xlu0 %996
        %998 = vrot.lane.b32.xlu0 %v815, 120
        %v999 = vpop.permute.xlu0 %998
        %v1016 = vmul.f32 %v936, %v969
        %v1017 = vmul.f32 %v937, %v971
        %v1018 = vmul.f32 %v938, %v973
        %v1019 = vmul.f32 %v939, %v975
        %v1020 = vmul.f32 %v940, %v977
        %v1021 = vmul.f32 %v941, %v979
        %v1022 = vmul.f32 %v942, %v981
        %v1023 = vmul.f32 %v943, %v983
        %v1024 = vmul.f32 %v944, %v985
        %v1025 = vmul.f32 %v945, %v987
        %v1026 = vmul.f32 %v946, %v989
        %v1027 = vmul.f32 %v947, %v991
        %v1028 = vmul.f32 %v948, %v993
        %v1029 = vmul.f32 %v949, %v995
        %v1030 = vmul.f32 %v950, %v997
        %v1031 = vmul.f32 %v951, %v999
        %v1032 = vlaneseq
        %v1033 = vshrl.u32 %v1032, 7
        %v1034 = vadd.s32 %v1033, 8
        %v1035 = vadd.s32 %v1033, 16
        %v1036 = vadd.s32 %v1033, 24
        %v1037 = vadd.s32 %v1033, 32
        %v1038 = vadd.s32 %v1033, 40
        %v1039 = vadd.s32 %v1033, 48
        %v1040 = vadd.s32 %v1033, 56
        %v1041 = vadd.s32 %v1033, 64
        %v1042 = vadd.s32 %v1033, 72
        %v1043 = vadd.s32 %v1033, 80
        %v1044 = vadd.s32 %v1033, 88
        %v1045 = vadd.s32 %v1033, 96
        %v1046 = vadd.s32 %v1033, 104
        %v1047 = vadd.s32 %v1033, 112
        %v1048 = vadd.s32 %v1033, 120
        %s1049 = smul.u32 %s17, 128
        %v1050 = vstv %s1049
        %v1051 = vadd.s32 %v1033, %v1050
        %v1052 = vadd.s32 %v1034, %v1050
        %v1053 = vadd.s32 %v1035, %v1050
        %v1054 = vadd.s32 %v1036, %v1050
        %v1055 = vadd.s32 %v1037, %v1050
        %v1056 = vadd.s32 %v1038, %v1050
        %v1057 = vadd.s32 %v1039, %v1050
        %v1058 = vadd.s32 %v1040, %v1050
        %v1059 = vadd.s32 %v1041, %v1050
        %v1060 = vadd.s32 %v1042, %v1050
        %v1061 = vadd.s32 %v1043, %v1050
        %v1062 = vadd.s32 %v1044, %v1050
        %v1063 = vadd.s32 %v1045, %v1050
        %v1064 = vadd.s32 %v1046, %v1050
        %v1065 = vadd.s32 %v1047, %v1050
        %v1066 = vadd.s32 %v1048, %v1050
        %vm1067 = vcmp.lt.s32.totalorder %v1051, 200
        %vm1068 = vcmp.lt.s32.totalorder %v1052, 200
        %vm1069 = vcmp.lt.s32.totalorder %v1053, 200
        %vm1070 = vcmp.lt.s32.totalorder %v1054, 200
        %vm1071 = vcmp.lt.s32.totalorder %v1055, 200
        %vm1072 = vcmp.lt.s32.totalorder %v1056, 200
        %vm1073 = vcmp.lt.s32.totalorder %v1057, 200
        %vm1074 = vcmp.lt.s32.totalorder %v1058, 200
        %vm1075 = vcmp.lt.s32.totalorder %v1059, 200
        %vm1076 = vcmp.lt.s32.totalorder %v1060, 200
        %vm1077 = vcmp.lt.s32.totalorder %v1061, 200
        %vm1078 = vcmp.lt.s32.totalorder %v1062, 200
        %vm1079 = vcmp.lt.s32.totalorder %v1063, 200
        %vm1080 = vcmp.lt.s32.totalorder %v1064, 200
        %vm1081 = vcmp.lt.s32.totalorder %v1065, 200
        %vm1082 = vcmp.lt.s32.totalorder %v1066, 200
        %v1083 = vsel %vm1067, 1, 0
        %v1084 = vsel %vm1068, 1, 0
        %v1085 = vsel %vm1069, 1, 0
        %v1086 = vsel %vm1070, 1, 0
        %v1087 = vsel %vm1071, 1, 0
        %v1088 = vsel %vm1072, 1, 0
        %v1089 = vsel %vm1073, 1, 0
        %v1090 = vsel %vm1074, 1, 0
        %v1091 = vsel %vm1075, 1, 0
        %v1092 = vsel %vm1076, 1, 0
        %v1093 = vsel %vm1077, 1, 0
        %v1094 = vsel %vm1078, 1, 0
        %v1095 = vsel %vm1079, 1, 0
        %v1096 = vsel %vm1080, 1, 0
        %v1097 = vsel %vm1081, 1, 0
        %v1098 = vsel %vm1082, 1, 0
        %vm1099 = vcmp.eq.s32.totalorder %v1083, 1
        %vm1100 = vcmp.eq.s32.totalorder %v1084, 1
        %vm1101 = vcmp.eq.s32.totalorder %v1085, 1
        %vm1102 = vcmp.eq.s32.totalorder %v1086, 1
        %vm1103 = vcmp.eq.s32.totalorder %v1087, 1
        %vm1104 = vcmp.eq.s32.totalorder %v1088, 1
        %vm1105 = vcmp.eq.s32.totalorder %v1089, 1
        %vm1106 = vcmp.eq.s32.totalorder %v1090, 1
        %vm1107 = vcmp.eq.s32.totalorder %v1091, 1
        %vm1108 = vcmp.eq.s32.totalorder %v1092, 1
        %vm1109 = vcmp.eq.s32.totalorder %v1093, 1
        %vm1110 = vcmp.eq.s32.totalorder %v1094, 1
        %vm1111 = vcmp.eq.s32.totalorder %v1095, 1
        %vm1112 = vcmp.eq.s32.totalorder %v1096, 1
        %vm1113 = vcmp.eq.s32.totalorder %v1097, 1
        %vm1114 = vcmp.eq.s32.totalorder %v1098, 1
        %v1115 = vsel %vm1099, %v1016, 0.0
        %v1116 = vsel %vm1100, %v1017, 0.0
        %v1117 = vsel %vm1101, %v1018, 0.0
        %v1118 = vsel %vm1102, %v1019, 0.0
        %v1119 = vsel %vm1103, %v1020, 0.0
        %v1120 = vsel %vm1104, %v1021, 0.0
        %v1121 = vsel %vm1105, %v1022, 0.0
        %v1122 = vsel %vm1106, %v1023, 0.0
        %v1123 = vsel %vm1107, %v1024, 0.0
        %v1124 = vsel %vm1108, %v1025, 0.0
        %v1125 = vsel %vm1109, %v1026, 0.0
        %v1126 = vsel %vm1110, %v1027, 0.0
        %v1127 = vsel %vm1111, %v1028, 0.0
        %v1128 = vsel %vm1112, %v1029, 0.0
        %v1129 = vsel %vm1113, %v1030, 0.0
        %v1130 = vsel %vm1114, %v1031, 0.0
        %v1131 = vld [vmem:[#allocation2] sm:$0x1]
        %vm1132 = vcmask 64512
        %v1133 = vsel %vm1132, %v1115, 0.0
        %v1134 = vsel %vm1132, %v1116, 0.0
        %v1135 = vadd.f32 %v1133, %v1134
        %v1136 = vsel %vm1132, %v1117, 0.0
        %v1137 = vadd.f32 %v1135, %v1136
        %v1138 = vsel %vm1132, %v1118, 0.0
        %v1139 = vadd.f32 %v1137, %v1138
        %v1140 = vsel %vm1132, %v1119, 0.0
        %v1141 = vadd.f32 %v1139, %v1140
        %v1142 = vsel %vm1132, %v1120, 0.0
        %v1143 = vadd.f32 %v1141, %v1142
        %v1144 = vsel %vm1132, %v1121, 0.0
        %v1145 = vadd.f32 %v1143, %v1144
        %v1146 = vsel %vm1132, %v1122, 0.0
        %v1147 = vadd.f32 %v1145, %v1146
        %v1148 = vsel %vm1132, %v1123, 0.0
        %v1149 = vadd.f32 %v1147, %v1148
        %v1150 = vsel %vm1132, %v1124, 0.0
        %v1151 = vadd.f32 %v1149, %v1150
        %v1152 = vsel %vm1132, %v1125, 0.0
        %v1153 = vadd.f32 %v1151, %v1152
        %v1154 = vsel %vm1132, %v1126, 0.0
        %v1155 = vadd.f32 %v1153, %v1154
        %v1156 = vsel %vm1132, %v1127, 0.0
        %v1157 = vadd.f32 %v1155, %v1156
        %v1158 = vsel %vm1132, %v1128, 0.0
        %v1159 = vadd.f32 %v1157, %v1158
        %v1160 = vsel %vm1132, %v1129, 0.0
        %v1161 = vadd.f32 %v1159, %v1160
        %v1162 = vsel %vm1132, %v1130, 0.0
        %v1163 = vadd.f32 %v1161, %v1162
        %v1164 = vrot.slane %v1163, 4
        %v1165 = vadd.f32 %v1163, %v1164
        %v1166 = vrot.slane %v1165, 2
        %v1167 = vadd.f32 %v1165, %v1166
        %v1168 = vrot.slane %v1167, 1
        %v1169 = vadd.f32 %v1167, %v1168
        %v1170 = vadd.f32 %v1131, %v1169
        %vm1171 = vcmask 57344
        %1172 = vst.msk [vmem:[#allocation2] sm:$0x1] %vm1171, %v1170
        %p1173 = scmp.eq.s32.totalorder %s17, 1
        // Predicated region
        $region45: #{mutual_information_loss.1} parent=39 // pred_check
          %p1174 = pneg %p1173
        $region46: #{mutual_information_loss.1} parent=39 // pred_check_branch
          %1176 = sbr.rel (%p1174) target = $region48
        $region47: #{mutual_information_loss.1} parent=39 // pred_region
          %v1177 = vld [vmem:[#allocation2] sm:$0x1]
          %v1178 = vsel %vm1171, %v1177, 0.0
          %1179 = vadd.xlane.f32.xlu0 %v1178
          %v1180 = vpop.xlane.xlu0 %1179
          %v1181 = vmul.f32 %v1180, 0.005
          %vm1182 = vcmask 0
          %1183 = vst.msk [vmem:[#allocation3] sm:$0x1] %vm1182, %v1181
        $region48: #{mutual_information_loss.1} parent=39 // pred_fallthru
          _
        // Predicated region
        $region49: #{mutual_information_loss.1} parent=39 // pred_check
          %p1184 = pneg %p145
        $region50: #{mutual_information_loss.1} parent=39 // pred_check_branch
          %1186 = sbr.rel (%p1184) target = $region52
        $region51: #{mutual_information_loss.1} parent=39 // pred_region
          %s1188 = ssub.s32 16, 16
          %1189 = vsyncadd [#allocation4], %s1188
          %s1191 = sshll.u32 [#allocation3], 4
          %s1192 = int_to_ptr.vmem [resolvable:$true] %s1191
          %1194 = dma.vmem_to_hbm [thread:$0]  %s1192, 16, %s5, [#allocation4]
        $region52: #{mutual_information_loss.1} parent=39 // pred_fallthru
          _
        // Predicated region
        $region53: #{mutual_information_loss.1} parent=39 // pred_check
          %p1195 = pneg %p145
        $region54: #{mutual_information_loss.1} parent=39 // pred_check_branch
          %1197 = sbr.rel (%p1195) target = $region56
        $region55: #{mutual_information_loss.1} parent=39 // pred_region
          %1198 = dma.done [#allocation4], 16
        $region56: #{mutual_information_loss.1} parent=39 // pred_fallthru
          _
      $region40: #{mutual_information_loss.1} parent=5 // pred_fallthru
        _
      %p1199 = scmp.le.s32.totalorder 2, %s12
      // Predicated region
      $region57: #{mutual_information_loss.1} parent=5 // pred_check
        %p1200 = pneg %p1199
      $region58: #{mutual_information_loss.1} parent=5 // pred_check_branch
        %1202 = sbr.rel (%p1200) target = $region60
      $region59: #{mutual_information_loss.1} parent=5 // pred_region
        %s1203 = ssub.s32 %s12, 2
      $region60: #{mutual_information_loss.1} parent=5 // pred_fallthru
        _
    $region6: #{mutual_information_loss.1} parent=1 // loop_footer
      %s16 = sadd.s32 1, %s12
    $region7: #{mutual_information_loss.1} parent=1 // loop_footer_branch
      %11 = sbr.rel target = $region3
    $region8: #{mutual_information_loss.1} parent=1 // loop_exit
      _
    %1204 = vsyncpa [#allocation4], 1
    %s1205 = scalar_lea.sflag [#allocation4], 1
    %1206 = vsyncpa %s1205, 1

</llo_original>
